<compile_context>
chip_gen: v7x
topology: tpu7x:2x2x1
jax: 0.10.0
libtpu: 0.0.40
codegen_flags: <defaults>
</compile_context>

<pallas_src>
import jax
import jax.numpy as jnp
from jax.experimental import pallas as pl
from jax.experimental.pallas import tpu as pltpu


# ----------------------------------------------------------------------------
# Pallas kernel: fused  out = relu(x @ W0 + b0) . w1_row + b1   (per batch tile)
# ----------------------------------------------------------------------------
def _critic_kernel(x_ref, w0_ref, b0_ref, w1_ref, b1_ref, o_ref):
    # x_ref : [TB, F]   bf16 (VMEM)
    # w0_ref: [F, HP]   bf16 (VMEM, resident)
    # b0_ref: [1, HP]   f32
    # w1_ref: [1, HP]   f32  (fc_1 weight as a row)
    # b1_ref: [1, 1]    f32
    # o_ref : [TB, 1]   f32
    # fc_0 on the MXU: bf16 inputs, f32 accumulation.
    h = jnp.dot(x_ref[...], w0_ref[...], preferred_element_type=jnp.float32)
    h = jnp.maximum(h + b0_ref[...], 0.0)          # bias + ReLU in f32 on the VPU
    # fc_1 (N=1): VPU multiply + XLU lane reduction instead of a 1-wide MXU matmul.
    out = jnp.sum(h * w1_ref[...], axis=-1, keepdims=True)
    o_ref[...] = out + b1_ref[...]


def _round_up(x, m):
    return ((x + m - 1) // m) * m


def critic_forward(x, w0, b0, w1, b1):
    """Run the Critic forward pass on a Pallas TPU kernel.

    x : [B, C, H, W] (NCHW, like PyTorch), already-flat [B, F], or a single
        unbatched observation (<=3-D) which is treated as batch 1.
    w0: [F, hidden]   (= fc_0.weight.T)
    b0: [hidden]
    w1: [hidden, 1]   (= fc_1.weight.T)
    b1: [1]
    returns: [B, 1] float32
    """
    F = w0.shape[0]
    hidden = w0.shape[1]

    # --- flatten, matching torch.flatten semantics (and allowing [B, F]) ----
    if x.ndim >= 4:
        x2d = x.reshape(x.shape[0], -1)            # flatten(start_dim=1)
    elif x.ndim == 2 and x.shape[1] == F:
        x2d = x                                    # already [B, F]
    else:
        x2d = x.reshape(1, -1)                     # PyTorch single-sample path
    B = x2d.shape[0]
    assert x2d.shape[1] == F, f"flattened feature dim {x2d.shape[1]} != {F}"

    # --- pad hidden dim to a multiple of 128 lanes (zeros -> exact) ---------
    HP = _round_up(hidden, 128)
    w0p = jnp.zeros((F, HP), jnp.float32).at[:, :hidden].set(
        w0.astype(jnp.float32)).astype(jnp.bfloat16)
    b0p = jnp.zeros((1, HP), jnp.float32).at[:, :hidden].set(
        b0.reshape(1, hidden).astype(jnp.float32))
    w1p = jnp.zeros((1, HP), jnp.float32).at[:, :hidden].set(
        w1.reshape(1, hidden).astype(jnp.float32))
    b1p = b1.reshape(1, 1).astype(jnp.float32)

    # --- pick batch tile: multiple of 8 sublanes, bounded by a VMEM budget --
    tb = (12 << 20) // max(1, 2 * 2 * F)           # ~12 MiB for 2x bf16 x-tiles
    tb = max(8, min(256, (tb // 8) * 8))
    tb = min(tb, max(8, _round_up(B, 8)))          # don't over-tile tiny batches
    Bp = _round_up(B, tb)
    grid = (Bp // tb,)

    # zero-pad batch rows so every tile is full (padded rows are sliced off)
    x_bf16 = x2d.astype(jnp.bfloat16)
    if Bp != B:
        x_bf16 = jnp.zeros((Bp, F), jnp.bfloat16).at[:B].set(x_bf16)

    # --- derive VMEM limit from the actual tiles (<= 48 MiB for v7x) --------
    tile_bytes = (
        2 * tb * F * 2        # x tile, double-buffered, bf16
        + 2 * F * HP * 2      # w0 (counted double-buffered, conservative), bf16
        + 4 * HP * 4          # b0 / w1 rows
        + 2 * tb * 4          # output tile, double-buffered
        + 2 * tb * HP * 4     # headroom for f32 intermediates
    )
    vmem_limit = int(min(48 << 20, max(tile_bytes + (2 << 20), 16 << 20)))

    out = pl.pallas_call(
        _critic_kernel,
        out_shape=jax.ShapeDtypeStruct((Bp, 1), jnp.float32),
        grid=grid,
        in_specs=[
            pl.BlockSpec((tb, F), lambda i: (i, 0)),   # x: streamed per batch tile
            pl.BlockSpec((F, HP), lambda i: (0, 0)),   # w0: resident
            pl.BlockSpec((1, HP), lambda i: (0, 0)),   # b0: resident
            pl.BlockSpec((1, HP), lambda i: (0, 0)),   # w1 row: resident
            pl.BlockSpec((1, 1), lambda i: (0, 0)),    # b1: resident
        ],
        out_specs=pl.BlockSpec((tb, 1), lambda i: (i, 0)),
        compiler_params=pltpu.CompilerParams(
            dimension_semantics=("parallel",),
            vmem_limit_bytes=vmem_limit,
        ),
    )(x_bf16, w0p, b0p, w1p, b1p)

    return out[:B]


# ----------------------------------------------------------------------------
# Deterministic parameter init mirroring Critic.init_weights():
#   weight ~ Normal(0, 0.5), bias ~ Uniform(-0.3, 0.3)
# ----------------------------------------------------------------------------
def init_critic_params(key, flat_state_space, hidden=100):
    k0w, k0b, k1w, k1b = jax.random.split(key, 4)
    # stored transposed: (in_features, out_features)
    w0 = 0.5 * jax.random.normal(k0w, (flat_state_space, hidden), dtype=jnp.float32)
    b0 = jax.random.uniform(k0b, (hidden,), minval=-0.3, maxval=0.3, dtype=jnp.float32)
    w1 = 0.5 * jax.random.normal(k1w, (hidden, 1), dtype=jnp.float32)
    b1 = jax.random.uniform(k1b, (1,), minval=-0.3, maxval=0.3, dtype=jnp.float32)
    return w0, b0, w1, b1


if __name__ == "__main__":
    key = jax.random.PRNGKey(0)

    # state_space = (C, H, W); small shapes
    B, C, Hs, Ws = 2, 4, 16, 16
    flat = C * Hs * Ws          # 1024
    hidden = 100

    k_x, k_p = jax.random.split(key)
    x = jax.random.normal(k_x, (B, C, Hs, Ws), dtype=jnp.float32)
    w0, b0, w1, b1 = init_critic_params(k_p, flat, hidden)

    out = critic_forward(x, w0, b0, w1, b1)
    out = jax.block_until_ready(out)
    assert out.shape == (B, 1)

    # Pure-JAX reference matching the kernel's bf16-input / f32-accumulate path
    x2d = x.reshape(B, -1)
    h_ref = jnp.maximum(
        jnp.dot(x2d.astype(jnp.bfloat16), w0.astype(jnp.bfloat16),
                preferred_element_type=jnp.float32) + b0, 0.0)
    ref_bf16 = h_ref @ w1 + b1
    assert jnp.allclose(out, ref_bf16, atol=1e-2, rtol=1e-3), (out, ref_bf16)

    # Looser sanity check against the exact f32 forward pass
    ref_f32 = jnp.maximum(x2d @ w0 + b0, 0.0) @ w1 + b1
    assert jnp.allclose(out, ref_f32, atol=5e-1, rtol=5e-2), (out, ref_f32)

    print("KERNEL_OK")
</pallas_src>

<mosaic_0001>
module attributes {stable_mosaic.version = 11 : i64} {
  func.func @_critic_kernel(%arg0: i32, %arg1: memref<8x1024xbf16, #tpu.memory_space<vmem>>, %arg2: memref<1024x128xbf16, #tpu.memory_space<vmem>>, %arg3: memref<1x128xf32, #tpu.memory_space<vmem>>, %arg4: memref<1x128xf32, #tpu.memory_space<vmem>>, %arg5: memref<1x1xf32, #tpu.memory_space<vmem>>, %arg6: memref<8x1xf32, #tpu.memory_space<vmem>>) attributes {dimension_semantics = [#tpu.dimension_semantics<parallel>], iteration_bounds = array<i64: 1>, scalar_prefetch = 0 : i64, scratch_operands = 0 : i64, tpu.core_type = #tpu.core_type<tc>, window_params = [{transform_indices = @transform_0, window_bounds = array<i64: 8, 1024>}, {pipeline_mode = #tpu.pipeline_mode<synchronous>, transform_indices = @transform_1, window_bounds = array<i64: 1024, 128>}, {pipeline_mode = #tpu.pipeline_mode<synchronous>, transform_indices = @transform_2, window_bounds = array<i64: 1, 128>}, {pipeline_mode = #tpu.pipeline_mode<synchronous>, transform_indices = @transform_3, window_bounds = array<i64: 1, 128>}, {pipeline_mode = #tpu.pipeline_mode<synchronous>, transform_indices = @transform_4, window_bounds = array<i64: 1, 1>}, {transform_indices = @transform_5, window_bounds = array<i64: 8, 1>}]} {
    %c0 = arith.constant 0 : index
    %c0_0 = arith.constant 0 : index
    %0 = vector.load %arg1[%c0, %c0_0] : memref<8x1024xbf16, #tpu.memory_space<vmem>>, vector<8x1024xbf16>
    %c0_1 = arith.constant 0 : index
    %c0_2 = arith.constant 0 : index
    %1 = vector.load %arg2[%c0_1, %c0_2] : memref<1024x128xbf16, #tpu.memory_space<vmem>>, vector<1024x128xbf16>
    %cst = arith.constant dense<0.000000e+00> : vector<8x128xf32>
    %2 = tpu.matmul %0, %1, %cst {dimension_numbers = #tpu.dot_dimension_numbers<[1], [0], [0], [1], [0, 0, 1, 1], [], []>} : vector<8x1024xbf16>, vector<1024x128xbf16>, vector<8x128xf32> -> vector<8x128xf32>
    %c0_3 = arith.constant 0 : index
    %c0_4 = arith.constant 0 : index
    %3 = vector.load %arg3[%c0_3, %c0_4] : memref<1x128xf32, #tpu.memory_space<vmem>>, vector<1x128xf32>
    %4 = vector.broadcast %3 : vector<1x128xf32> to vector<8x128xf32>
    %5 = arith.addf %2, %4 : vector<8x128xf32>
    %cst_5 = arith.constant 0.000000e+00 : f32
    %6 = vector.broadcast %cst_5 : f32 to vector<8x128xf32>
    %7 = arith.maximumf %5, %6 : vector<8x128xf32>
    %c0_6 = arith.constant 0 : index
    %c0_7 = arith.constant 0 : index
    %8 = vector.load %arg4[%c0_6, %c0_7] : memref<1x128xf32, #tpu.memory_space<vmem>>, vector<1x128xf32>
    %9 = vector.broadcast %8 : vector<1x128xf32> to vector<8x128xf32>
    %10 = arith.mulf %7, %9 : vector<8x128xf32>
    %cst_8 = arith.constant dense<0.000000e+00> : vector<8xf32>
    %11 = vector.multi_reduction <add>, %10, %cst_8 [1] : vector<8x128xf32> to vector<8xf32>
    %12 = vector.shape_cast %11 : vector<8xf32> to vector<8x1xf32>
    %c0_9 = arith.constant 0 : index
    %c0_10 = arith.constant 0 : index
    %13 = vector.load %arg5[%c0_9, %c0_10] : memref<1x1xf32, #tpu.memory_space<vmem>>, vector<1x1xf32>
    %14 = vector.broadcast %13 : vector<1x1xf32> to vector<8x1xf32>
    %15 = arith.addf %12, %14 : vector<8x1xf32>
    %c0_11 = arith.constant 0 : index
    %c0_12 = arith.constant 0 : index
    %16 = vector.load %arg6[%c0_11, %c0_12] : memref<8x1xf32, #tpu.memory_space<vmem>>, vector<8x1xf32>
    tpu.vector_store %arg6[%c0_11, %c0_12], %15 {strides = array<i32>} : memref<8x1xf32, #tpu.memory_space<vmem>>, vector<8x1xf32>,
    return
  }
  func.func @transform_0(%arg0: i32) -> (i32, i32) {
    %c0_i32 = arith.constant 0 : i32
    %c0_i32_0 = arith.constant 0 : i32
    return %arg0, %c0_i32 : i32, i32
  }
  func.func @transform_1(%arg0: i32) -> (i32, i32) {
    %c0_i32 = arith.constant 0 : i32
    %c0_i32_0 = arith.constant 0 : i32
    %c0_i32_1 = arith.constant 0 : i32
    return %c0_i32, %c0_i32_0 : i32, i32
  }
  func.func @transform_2(%arg0: i32) -> (i32, i32) {
    %c0_i32 = arith.constant 0 : i32
    %c0_i32_0 = arith.constant 0 : i32
    %c0_i32_1 = arith.constant 0 : i32
    return %c0_i32, %c0_i32_0 : i32, i32
  }
  func.func @transform_3(%arg0: i32) -> (i32, i32) {
    %c0_i32 = arith.constant 0 : i32
    %c0_i32_0 = arith.constant 0 : i32
    %c0_i32_1 = arith.constant 0 : i32
    return %c0_i32, %c0_i32_0 : i32, i32
  }
  func.func @transform_4(%arg0: i32) -> (i32, i32) {
    %c0_i32 = arith.constant 0 : i32
    %c0_i32_0 = arith.constant 0 : i32
    %c0_i32_1 = arith.constant 0 : i32
    return %c0_i32, %c0_i32_0 : i32, i32
  }
  func.func @transform_5(%arg0: i32) -> (i32, i32) {
    %c0_i32 = arith.constant 0 : i32
    %c0_i32_0 = arith.constant 0 : i32
    return %arg0, %c0_i32 : i32, i32
  }
}

</mosaic_0001>

<llo_original>
// kernel: tpu_custom_call.1
$region0: #{tpu_custom_call.1}
  #allocation0 [shape = 'u32[]', space=smem, size = 0x4, offset = 0x4, fixed_abs, tag = 'smem constant byte address 0x4 - core index']
  #allocation1 [shape = 'u32[144,128]{1,0:T(1,128)}', space=vmem, size = 0x12000, scoped, tag = 'internal scratch']
  #allocation2 [shape = 'f32[1,1]{1,0:T(1,128)S(1)}', space=vmem, size = 0x200, scoped, tag = 'scoped memory for tpu_custom_call.1']
  %s0 = inlined_call_operand.hbm [shape: bf16[8,1024], index: 0, kind: input, shape index: {}]
  %s1 = inlined_call_operand.hbm [shape: bf16[1024,128], index: 1, kind: input, shape index: {}]
  %s2 = inlined_call_operand.vmem [shape: f32[1,128], index: 2, kind: input, shape index: {}]
  %s3 = inlined_call_operand.vmem [shape: f32[1,128], index: 3, kind: input, shape index: {}]
  %s4 = inlined_call_operand.<no memory space> [shape: f32[1,1], index: 4, kind: input, shape index: {}]
  %s5 = inlined_call_operand.vmem [shape: f32[8,1], index: 5, kind: output, shape index: {}]
  %s6 = sld [smem:[#allocation0]]
  $region38: #{tpu_custom_call.1} parent=0
    _
  %s8 = ssub.s32 1, %s6
  %s9 = scalar_select 0, %s8, %s6
  %v10 = vstv %s4
  %11 = vst [vmem:[#allocation2] sm:$0x1] %v10
  $region1: #{tpu_custom_call.1} parent=0
    #allocation3 [shape = 'u8[16384]{0}', space=vmem, size = 0x4000, scoped, tag = 'input window, operand 0, single buffered']
    #allocation4 [shape = 's32[1]{0}', space=sflag, size = 0x4, scoped, tag = 'scoped memory for tpu_custom_call.1']
    #allocation5 [shape = 'u8[262144]{0}', space=vmem, size = 0x40000, scoped, tag = 'input window, operand 1, single buffered']
    #allocation6 [shape = 's32[1]{0}', space=sflag, size = 0x4, scoped, tag = 'scoped memory for tpu_custom_call.1']
    %12 = vsyncpa [#allocation4], 0
    %13 = vsyncpa [#allocation6], 0
    // Predicated region
    $region2: #{tpu_custom_call.1} parent=1 // pred_check
      _
    $region3: #{tpu_custom_call.1} parent=1 // pred_check_branch
      %15 = sbr.rel (0) target = $region5
    $region4: #{tpu_custom_call.1} parent=1 // pred_region
      %s17 = ssub.s32 512, 512
      %18 = vsyncadd [#allocation4], %s17
      %s20 = sshll.u32 [#allocation3], 4
      %s21 = int_to_ptr.vmem [resolvable:$true] %s20
      %23 = dma.hbm_to_vmem [thread:$0]  %s0, 512, %s21, [#allocation4]
    $region5: #{tpu_custom_call.1} parent=1 // pred_fallthru
      _
    // Predicated region
    $region6: #{tpu_custom_call.1} parent=1 // pred_check
      _
    $region7: #{tpu_custom_call.1} parent=1 // pred_check_branch
      %25 = sbr.rel (0) target = $region9
    $region8: #{tpu_custom_call.1} parent=1 // pred_region
      %s27 = ssub.s32 8192, 8192
      %28 = vsyncadd [#allocation6], %s27
      %s29 = sshll.u32 [#allocation5], 4
      %s30 = int_to_ptr.vmem [resolvable:$true] %s29
      %35 = dma.hbm_to_vmem [thread:$0]  %s1, 8192, %s30, [#allocation6], 64, 64, 4
    $region9: #{tpu_custom_call.1} parent=1 // pred_fallthru
      _
    // Predicated region
    $region10: #{tpu_custom_call.1} parent=1 // pred_check
      _
    $region11: #{tpu_custom_call.1} parent=1 // pred_check_branch
      %37 = sbr.rel (0) target = $region13
    $region12: #{tpu_custom_call.1} parent=1 // pred_region
      _
    $region13: #{tpu_custom_call.1} parent=1 // pred_fallthru
      _
    // Predicated region
    $region14: #{tpu_custom_call.1} parent=1 // pred_check
      _
    $region15: #{tpu_custom_call.1} parent=1 // pred_check_branch
      %39 = sbr.rel (0) target = $region17
    $region16: #{tpu_custom_call.1} parent=1 // pred_region
      _
    $region17: #{tpu_custom_call.1} parent=1 // pred_fallthru
      _
    // Predicated region
    $region18: #{tpu_custom_call.1} parent=1 // pred_check
      _
    $region19: #{tpu_custom_call.1} parent=1 // pred_check_branch
      %41 = sbr.rel (0) target = $region21
    $region20: #{tpu_custom_call.1} parent=1 // pred_region
      _
    $region21: #{tpu_custom_call.1} parent=1 // pred_fallthru
      _
    // Predicated region
    $region22: #{tpu_custom_call.1} parent=1 // pred_check
      _
    $region23: #{tpu_custom_call.1} parent=1 // pred_check_branch
      %43 = sbr.rel (0) target = $region25
    $region24: #{tpu_custom_call.1} parent=1 // pred_region
      %44 = dma.done [#allocation4], 512
    $region25: #{tpu_custom_call.1} parent=1 // pred_fallthru
      _
    // Predicated region
    $region26: #{tpu_custom_call.1} parent=1 // pred_check
      _
    $region27: #{tpu_custom_call.1} parent=1 // pred_check_branch
      %46 = sbr.rel (0) target = $region29
    $region28: #{tpu_custom_call.1} parent=1 // pred_region
      %47 = dma.done [#allocation6], 8192
    $region29: #{tpu_custom_call.1} parent=1 // pred_fallthru
      _
    %v49 = vld [vmem:[#allocation3] sm:$0xff]
    %v50 = vld [vmem:[#allocation3 + $0x8] sm:$0xff]
    %v51 = vld [vmem:[#allocation3 + $0x10] sm:$0xff]
    %v52 = vld [vmem:[#allocation3 + $0x18] sm:$0xff]
    %v53 = vld [vmem:[#allocation5] sm:$0xf]
    %v54 = vld [vmem:[#allocation5 + $0x4] sm:$0xf]
    %v55 = vld [vmem:[#allocation5 + $0x8] sm:$0xf]
    %v56 = vld [vmem:[#allocation5 + $0xc] sm:$0xf]
    %v57 = vld [vmem:[#allocation5 + $0x10] sm:$0xf]
    %v58 = vld [vmem:[#allocation5 + $0x14] sm:$0xf]
    %v59 = vld [vmem:[#allocation5 + $0x18] sm:$0xf]
    %v60 = vld [vmem:[#allocation5 + $0x1c] sm:$0xf]
    %v61 = vld [vmem:[#allocation5 + $0x20] sm:$0xf]
    %v62 = vld [vmem:[#allocation5 + $0x24] sm:$0xf]
    %v63 = vld [vmem:[#allocation5 + $0x28] sm:$0xf]
    %v64 = vld [vmem:[#allocation5 + $0x2c] sm:$0xf]
    %v65 = vld [vmem:[#allocation5 + $0x30] sm:$0xf]
    %v66 = vld [vmem:[#allocation5 + $0x34] sm:$0xf]
    %v67 = vld [vmem:[#allocation5 + $0x38] sm:$0xf]
    %v68 = vld [vmem:[#allocation5 + $0x3c] sm:$0xf]
    %v69 = vld [vmem:[#allocation5 + $0x40] sm:$0xf]
    %v70 = vld [vmem:[#allocation5 + $0x44] sm:$0xf]
    %v71 = vld [vmem:[#allocation5 + $0x48] sm:$0xf]
    %v72 = vld [vmem:[#allocation5 + $0x4c] sm:$0xf]
    %v73 = vld [vmem:[#allocation5 + $0x50] sm:$0xf]
    %v74 = vld [vmem:[#allocation5 + $0x54] sm:$0xf]
    %v75 = vld [vmem:[#allocation5 + $0x58] sm:$0xf]
    %v76 = vld [vmem:[#allocation5 + $0x5c] sm:$0xf]
    %v77 = vld [vmem:[#allocation5 + $0x60] sm:$0xf]
    %v78 = vld [vmem:[#allocation5 + $0x64] sm:$0xf]
    %v79 = vld [vmem:[#allocation5 + $0x68] sm:$0xf]
    %v80 = vld [vmem:[#allocation5 + $0x6c] sm:$0xf]
    %v81 = vld [vmem:[#allocation5 + $0x70] sm:$0xf]
    %v82 = vld [vmem:[#allocation5 + $0x74] sm:$0xf]
    %v83 = vld [vmem:[#allocation5 + $0x78] sm:$0xf]
    %v84 = vld [vmem:[#allocation5 + $0x7c] sm:$0xf]
    %v85 = vld [vmem:[#allocation5 + $0x80] sm:$0xf]
    %v86 = vld [vmem:[#allocation5 + $0x84] sm:$0xf]
    %v87 = vld [vmem:[#allocation5 + $0x88] sm:$0xf]
    %v88 = vld [vmem:[#allocation5 + $0x8c] sm:$0xf]
    %v89 = vld [vmem:[#allocation5 + $0x90] sm:$0xf]
    %v90 = vld [vmem:[#allocation5 + $0x94] sm:$0xf]
    %v91 = vld [vmem:[#allocation5 + $0x98] sm:$0xf]
    %v92 = vld [vmem:[#allocation5 + $0x9c] sm:$0xf]
    %v93 = vld [vmem:[#allocation5 + $0xa0] sm:$0xf]
    %v94 = vld [vmem:[#allocation5 + $0xa4] sm:$0xf]
    %v95 = vld [vmem:[#allocation5 + $0xa8] sm:$0xf]
    %v96 = vld [vmem:[#allocation5 + $0xac] sm:$0xf]
    %v97 = vld [vmem:[#allocation5 + $0xb0] sm:$0xf]
    %v98 = vld [vmem:[#allocation5 + $0xb4] sm:$0xf]
    %v99 = vld [vmem:[#allocation5 + $0xb8] sm:$0xf]
    %v100 = vld [vmem:[#allocation5 + $0xbc] sm:$0xf]
    %v101 = vld [vmem:[#allocation5 + $0xc0] sm:$0xf]
    %v102 = vld [vmem:[#allocation5 + $0xc4] sm:$0xf]
    %v103 = vld [vmem:[#allocation5 + $0xc8] sm:$0xf]
    %v104 = vld [vmem:[#allocation5 + $0xcc] sm:$0xf]
    %v105 = vld [vmem:[#allocation5 + $0xd0] sm:$0xf]
    %v106 = vld [vmem:[#allocation5 + $0xd4] sm:$0xf]
    %v107 = vld [vmem:[#allocation5 + $0xd8] sm:$0xf]
    %v108 = vld [vmem:[#allocation5 + $0xdc] sm:$0xf]
    %v109 = vld [vmem:[#allocation5 + $0xe0] sm:$0xf]
    %v110 = vld [vmem:[#allocation5 + $0xe4] sm:$0xf]
    %v111 = vld [vmem:[#allocation5 + $0xe8] sm:$0xf]
    %v112 = vld [vmem:[#allocation5 + $0xec] sm:$0xf]
    %v113 = vld [vmem:[#allocation5 + $0xf0] sm:$0xf]
    %v114 = vld [vmem:[#allocation5 + $0xf4] sm:$0xf]
    %v115 = vld [vmem:[#allocation5 + $0xf8] sm:$0xf]
    %v116 = vld [vmem:[#allocation5 + $0xfc] sm:$0xf]
    %v117 = vld [vmem:[#allocation5 + $0x100] sm:$0xf]
    %v118 = vld [vmem:[#allocation5 + $0x104] sm:$0xf]
    %v119 = vld [vmem:[#allocation5 + $0x108] sm:$0xf]
    %v120 = vld [vmem:[#allocation5 + $0x10c] sm:$0xf]
    %v121 = vld [vmem:[#allocation5 + $0x110] sm:$0xf]
    %v122 = vld [vmem:[#allocation5 + $0x114] sm:$0xf]
    %v123 = vld [vmem:[#allocation5 + $0x118] sm:$0xf]
    %v124 = vld [vmem:[#allocation5 + $0x11c] sm:$0xf]
    %v125 = vld [vmem:[#allocation5 + $0x120] sm:$0xf]
    %v126 = vld [vmem:[#allocation5 + $0x124] sm:$0xf]
    %v127 = vld [vmem:[#allocation5 + $0x128] sm:$0xf]
    %v128 = vld [vmem:[#allocation5 + $0x12c] sm:$0xf]
    %v129 = vld [vmem:[#allocation5 + $0x130] sm:$0xf]
    %v130 = vld [vmem:[#allocation5 + $0x134] sm:$0xf]
    %v131 = vld [vmem:[#allocation5 + $0x138] sm:$0xf]
    %v132 = vld [vmem:[#allocation5 + $0x13c] sm:$0xf]
    %v133 = vld [vmem:[#allocation5 + $0x140] sm:$0xf]
    %v134 = vld [vmem:[#allocation5 + $0x144] sm:$0xf]
    %v135 = vld [vmem:[#allocation5 + $0x148] sm:$0xf]
    %v136 = vld [vmem:[#allocation5 + $0x14c] sm:$0xf]
    %v137 = vld [vmem:[#allocation5 + $0x150] sm:$0xf]
    %v138 = vld [vmem:[#allocation5 + $0x154] sm:$0xf]
    %v139 = vld [vmem:[#allocation5 + $0x158] sm:$0xf]
    %v140 = vld [vmem:[#allocation5 + $0x15c] sm:$0xf]
    %v141 = vld [vmem:[#allocation5 + $0x160] sm:$0xf]
    %v142 = vld [vmem:[#allocation5 + $0x164] sm:$0xf]
    %v143 = vld [vmem:[#allocation5 + $0x168] sm:$0xf]
    %v144 = vld [vmem:[#allocation5 + $0x16c] sm:$0xf]
    %v145 = vld [vmem:[#allocation5 + $0x170] sm:$0xf]
    %v146 = vld [vmem:[#allocation5 + $0x174] sm:$0xf]
    %v147 = vld [vmem:[#allocation5 + $0x178] sm:$0xf]
    %v148 = vld [vmem:[#allocation5 + $0x17c] sm:$0xf]
    %v149 = vld [vmem:[#allocation5 + $0x180] sm:$0xf]
    %v150 = vld [vmem:[#allocation5 + $0x184] sm:$0xf]
    %v151 = vld [vmem:[#allocation5 + $0x188] sm:$0xf]
    %v152 = vld [vmem:[#allocation5 + $0x18c] sm:$0xf]
    %v153 = vld [vmem:[#allocation5 + $0x190] sm:$0xf]
    %v154 = vld [vmem:[#allocation5 + $0x194] sm:$0xf]
    %v155 = vld [vmem:[#allocation5 + $0x198] sm:$0xf]
    %v156 = vld [vmem:[#allocation5 + $0x19c] sm:$0xf]
    %v157 = vld [vmem:[#allocation5 + $0x1a0] sm:$0xf]
    %v158 = vld [vmem:[#allocation5 + $0x1a4] sm:$0xf]
    %v159 = vld [vmem:[#allocation5 + $0x1a8] sm:$0xf]
    %v160 = vld [vmem:[#allocation5 + $0x1ac] sm:$0xf]
    %v161 = vld [vmem:[#allocation5 + $0x1b0] sm:$0xf]
    %v162 = vld [vmem:[#allocation5 + $0x1b4] sm:$0xf]
    %v163 = vld [vmem:[#allocation5 + $0x1b8] sm:$0xf]
    %v164 = vld [vmem:[#allocation5 + $0x1bc] sm:$0xf]
    %v165 = vld [vmem:[#allocation5 + $0x1c0] sm:$0xf]
    %v166 = vld [vmem:[#allocation5 + $0x1c4] sm:$0xf]
    %v167 = vld [vmem:[#allocation5 + $0x1c8] sm:$0xf]
    %v168 = vld [vmem:[#allocation5 + $0x1cc] sm:$0xf]
    %v169 = vld [vmem:[#allocation5 + $0x1d0] sm:$0xf]
    %v170 = vld [vmem:[#allocation5 + $0x1d4] sm:$0xf]
    %v171 = vld [vmem:[#allocation5 + $0x1d8] sm:$0xf]
    %v172 = vld [vmem:[#allocation5 + $0x1dc] sm:$0xf]
    %v173 = vld [vmem:[#allocation5 + $0x1e0] sm:$0xf]
    %v174 = vld [vmem:[#allocation5 + $0x1e4] sm:$0xf]
    %v175 = vld [vmem:[#allocation5 + $0x1e8] sm:$0xf]
    %v176 = vld [vmem:[#allocation5 + $0x1ec] sm:$0xf]
    %v177 = vld [vmem:[#allocation5 + $0x1f0] sm:$0xf]
    %v178 = vld [vmem:[#allocation5 + $0x1f4] sm:$0xf]
    %v179 = vld [vmem:[#allocation5 + $0x1f8] sm:$0xf]
    %v180 = vld [vmem:[#allocation5 + $0x1fc] sm:$0xf]
    %v181 = vld [vmem:[%s2] sm:$0x1]
    %v183 = vlaneseq
    %v184 = vshrl.u32 %v183, 7
    %v185 = vsub.s32 0, %v184
    %v186 = vrot.slane %v181, %v185
    %v192 = vunpack.c.l.b16 %v49
    %v193 = vunpack.c.h.b16 %v49
    %v194 = vunpack.c.l.b16 %v50
    %v195 = vunpack.c.h.b16 %v50
    %v196 = vunpack.c.l.b16 %v51
    %v197 = vunpack.c.h.b16 %v51
    %v198 = vunpack.c.l.b16 %v52
    %v199 = vunpack.c.h.b16 %v52
    %v200 = vpack.c.b16 %v192, %v192
    %v201 = vpack.c.b16 %v193, %v193
    %v202 = vpack.c.b16 %v194, %v194
    %v203 = vpack.c.b16 %v195, %v195
    %v204 = vpack.c.b16 %v196, %v196
    %v205 = vpack.c.b16 %v197, %v197
    %v206 = vpack.c.b16 %v198, %v198
    %v207 = vpack.c.b16 %v199, %v199
    %v344 = vunpack.c.l.b16 %v53
    %v345 = vunpack.c.l.b16 %v54
    %v346 = vunpack.c.l.b16 %v55
    %v347 = vunpack.c.l.b16 %v56
    %v348 = vunpack.c.l.b16 %v57
    %v349 = vunpack.c.l.b16 %v58
    %v350 = vunpack.c.l.b16 %v59
    %v351 = vunpack.c.l.b16 %v60
    %v352 = vunpack.c.l.b16 %v61
    %v353 = vunpack.c.l.b16 %v62
    %v354 = vunpack.c.l.b16 %v63
    %v355 = vunpack.c.l.b16 %v64
    %v356 = vunpack.c.l.b16 %v65
    %v357 = vunpack.c.l.b16 %v66
    %v358 = vunpack.c.l.b16 %v67
    %v359 = vunpack.c.l.b16 %v68
    %v360 = vunpack.c.l.b16 %v69
    %v361 = vunpack.c.l.b16 %v70
    %v362 = vunpack.c.l.b16 %v71
    %v363 = vunpack.c.l.b16 %v72
    %v364 = vunpack.c.l.b16 %v73
    %v365 = vunpack.c.l.b16 %v74
    %v366 = vunpack.c.l.b16 %v75
    %v367 = vunpack.c.l.b16 %v76
    %v368 = vunpack.c.l.b16 %v77
    %v369 = vunpack.c.l.b16 %v78
    %v370 = vunpack.c.l.b16 %v79
    %v371 = vunpack.c.l.b16 %v80
    %v372 = vunpack.c.l.b16 %v81
    %v373 = vunpack.c.l.b16 %v82
    %v374 = vunpack.c.l.b16 %v83
    %v375 = vunpack.c.l.b16 %v84
    %v376 = vunpack.c.l.b16 %v85
    %v377 = vunpack.c.l.b16 %v86
    %v378 = vunpack.c.l.b16 %v87
    %v379 = vunpack.c.l.b16 %v88
    %v380 = vunpack.c.l.b16 %v89
    %v381 = vunpack.c.l.b16 %v90
    %v382 = vunpack.c.l.b16 %v91
    %v383 = vunpack.c.l.b16 %v92
    %v384 = vunpack.c.l.b16 %v93
    %v385 = vunpack.c.l.b16 %v94
    %v386 = vunpack.c.l.b16 %v95
    %v387 = vunpack.c.l.b16 %v96
    %v388 = vunpack.c.l.b16 %v97
    %v389 = vunpack.c.l.b16 %v98
    %v390 = vunpack.c.l.b16 %v99
    %v391 = vunpack.c.l.b16 %v100
    %v392 = vunpack.c.l.b16 %v101
    %v393 = vunpack.c.l.b16 %v102
    %v394 = vunpack.c.l.b16 %v103
    %v395 = vunpack.c.l.b16 %v104
    %v396 = vunpack.c.l.b16 %v105
    %v397 = vunpack.c.l.b16 %v106
    %v398 = vunpack.c.l.b16 %v107
    %v399 = vunpack.c.l.b16 %v108
    %v400 = vunpack.c.l.b16 %v109
    %v401 = vunpack.c.l.b16 %v110
    %v402 = vunpack.c.l.b16 %v111
    %v403 = vunpack.c.l.b16 %v112
    %v404 = vunpack.c.l.b16 %v113
    %v405 = vunpack.c.l.b16 %v114
    %v406 = vunpack.c.l.b16 %v115
    %v407 = vunpack.c.l.b16 %v116
    %v408 = vunpack.c.l.b16 %v117
    %v409 = vunpack.c.l.b16 %v118
    %v410 = vunpack.c.l.b16 %v119
    %v411 = vunpack.c.l.b16 %v120
    %v412 = vunpack.c.l.b16 %v121
    %v413 = vunpack.c.l.b16 %v122
    %v414 = vunpack.c.l.b16 %v123
    %v415 = vunpack.c.l.b16 %v124
    %v416 = vunpack.c.l.b16 %v125
    %v417 = vunpack.c.l.b16 %v126
    %v418 = vunpack.c.l.b16 %v127
    %v419 = vunpack.c.l.b16 %v128
    %v420 = vunpack.c.l.b16 %v129
    %v421 = vunpack.c.l.b16 %v130
    %v422 = vunpack.c.l.b16 %v131
    %v423 = vunpack.c.l.b16 %v132
    %v424 = vunpack.c.l.b16 %v133
    %v425 = vunpack.c.l.b16 %v134
    %v426 = vunpack.c.l.b16 %v135
    %v427 = vunpack.c.l.b16 %v136
    %v428 = vunpack.c.l.b16 %v137
    %v429 = vunpack.c.l.b16 %v138
    %v430 = vunpack.c.l.b16 %v139
    %v431 = vunpack.c.l.b16 %v140
    %v432 = vunpack.c.l.b16 %v141
    %v433 = vunpack.c.l.b16 %v142
    %v434 = vunpack.c.l.b16 %v143
    %v435 = vunpack.c.l.b16 %v144
    %v436 = vunpack.c.l.b16 %v145
    %v437 = vunpack.c.l.b16 %v146
    %v438 = vunpack.c.l.b16 %v147
    %v439 = vunpack.c.l.b16 %v148
    %v440 = vunpack.c.l.b16 %v149
    %v441 = vunpack.c.l.b16 %v150
    %v442 = vunpack.c.l.b16 %v151
    %v443 = vunpack.c.l.b16 %v152
    %v444 = vunpack.c.l.b16 %v153
    %v445 = vunpack.c.l.b16 %v154
    %v446 = vunpack.c.l.b16 %v155
    %v447 = vunpack.c.l.b16 %v156
    %v448 = vunpack.c.l.b16 %v157
    %v449 = vunpack.c.l.b16 %v158
    %v450 = vunpack.c.l.b16 %v159
    %v451 = vunpack.c.l.b16 %v160
    %v452 = vunpack.c.l.b16 %v161
    %v453 = vunpack.c.l.b16 %v162
    %v454 = vunpack.c.l.b16 %v163
    %v455 = vunpack.c.l.b16 %v164
    %v456 = vunpack.c.l.b16 %v165
    %v457 = vunpack.c.l.b16 %v166
    %v458 = vunpack.c.l.b16 %v167
    %v459 = vunpack.c.l.b16 %v168
    %v460 = vunpack.c.l.b16 %v169
    %v461 = vunpack.c.l.b16 %v170
    %v462 = vunpack.c.l.b16 %v171
    %v463 = vunpack.c.l.b16 %v172
    %v464 = vunpack.c.l.b16 %v173
    %v465 = vunpack.c.l.b16 %v174
    %v466 = vunpack.c.l.b16 %v175
    %v467 = vunpack.c.l.b16 %v176
    %v468 = vunpack.c.l.b16 %v177
    %v469 = vunpack.c.l.b16 %v178
    %v470 = vunpack.c.l.b16 %v179
    %v471 = vunpack.c.l.b16 %v180
    %v472 = vpack.c.b16 %v345, %v344
    %v473 = vpack.c.b16 %v347, %v346
    %v474 = vpack.c.b16 %v349, %v348
    %v475 = vpack.c.b16 %v351, %v350
    %v476 = vpack.c.b16 %v353, %v352
    %v477 = vpack.c.b16 %v355, %v354
    %v478 = vpack.c.b16 %v357, %v356
    %v479 = vpack.c.b16 %v359, %v358
    %v480 = vpack.c.b16 %v361, %v360
    %v481 = vpack.c.b16 %v363, %v362
    %v482 = vpack.c.b16 %v365, %v364
    %v483 = vpack.c.b16 %v367, %v366
    %v484 = vpack.c.b16 %v369, %v368
    %v485 = vpack.c.b16 %v371, %v370
    %v486 = vpack.c.b16 %v373, %v372
    %v487 = vpack.c.b16 %v375, %v374
    %v488 = vpack.c.b16 %v377, %v376
    %v489 = vpack.c.b16 %v379, %v378
    %v490 = vpack.c.b16 %v381, %v380
    %v491 = vpack.c.b16 %v383, %v382
    %v492 = vpack.c.b16 %v385, %v384
    %v493 = vpack.c.b16 %v387, %v386
    %v494 = vpack.c.b16 %v389, %v388
    %v495 = vpack.c.b16 %v391, %v390
    %v496 = vpack.c.b16 %v393, %v392
    %v497 = vpack.c.b16 %v395, %v394
    %v498 = vpack.c.b16 %v397, %v396
    %v499 = vpack.c.b16 %v399, %v398
    %v500 = vpack.c.b16 %v401, %v400
    %v501 = vpack.c.b16 %v403, %v402
    %v502 = vpack.c.b16 %v405, %v404
    %v503 = vpack.c.b16 %v407, %v406
    %v504 = vpack.c.b16 %v409, %v408
    %v505 = vpack.c.b16 %v411, %v410
    %v506 = vpack.c.b16 %v413, %v412
    %v507 = vpack.c.b16 %v415, %v414
    %v508 = vpack.c.b16 %v417, %v416
    %v509 = vpack.c.b16 %v419, %v418
    %v510 = vpack.c.b16 %v421, %v420
    %v511 = vpack.c.b16 %v423, %v422
    %v512 = vpack.c.b16 %v425, %v424
    %v513 = vpack.c.b16 %v427, %v426
    %v514 = vpack.c.b16 %v429, %v428
    %v515 = vpack.c.b16 %v431, %v430
    %v516 = vpack.c.b16 %v433, %v432
    %v517 = vpack.c.b16 %v435, %v434
    %v518 = vpack.c.b16 %v437, %v436
    %v519 = vpack.c.b16 %v439, %v438
    %v520 = vpack.c.b16 %v441, %v440
    %v521 = vpack.c.b16 %v443, %v442
    %v522 = vpack.c.b16 %v445, %v444
    %v523 = vpack.c.b16 %v447, %v446
    %v524 = vpack.c.b16 %v449, %v448
    %v525 = vpack.c.b16 %v451, %v450
    %v526 = vpack.c.b16 %v453, %v452
    %v527 = vpack.c.b16 %v455, %v454
    %v528 = vpack.c.b16 %v457, %v456
    %v529 = vpack.c.b16 %v459, %v458
    %v530 = vpack.c.b16 %v461, %v460
    %v531 = vpack.c.b16 %v463, %v462
    %v532 = vpack.c.b16 %v465, %v464
    %v533 = vpack.c.b16 %v467, %v466
    %v534 = vpack.c.b16 %v469, %v468
    %v535 = vpack.c.b16 %v471, %v470
    %600 = vmatprep.subr.bf16.mxu0 0
    %601 = vmatpush1.bf16.msra.mxu0 %v472
    %602 = vmatprep.subr.bf16.mxu0 0
    %603 = vmatpush1.bf16.msra.mxu0 %v473
    %604 = vmatprep.subr.bf16.mxu0 0
    %605 = vmatpush1.bf16.msra.mxu0 %v474
    %606 = vmatprep.subr.bf16.mxu0 0
    %607 = vmatpush1.bf16.msra.mxu0 %v475
    %608 = vmatprep.subr.bf16.mxu0 0
    %609 = vmatpush1.bf16.msra.mxu0 %v476
    %610 = vmatprep.subr.bf16.mxu0 0
    %611 = vmatpush1.bf16.msra.mxu0 %v477
    %612 = vmatprep.subr.bf16.mxu0 0
    %613 = vmatpush1.bf16.msra.mxu0 %v478
    %614 = vmatprep.subr.bf16.mxu0 0
    %615 = vmatpush1.bf16.msra.mxu0 %v479
    %616 = vmatprep.subr.bf16.mxu0 0
    %617 = vmatpush1.bf16.msra.mxu0 %v480
    %618 = vmatprep.subr.bf16.mxu0 0
    %619 = vmatpush1.bf16.msra.mxu0 %v481
    %620 = vmatprep.subr.bf16.mxu0 0
    %621 = vmatpush1.bf16.msra.mxu0 %v482
    %622 = vmatprep.subr.bf16.mxu0 0
    %623 = vmatpush1.bf16.msra.mxu0 %v483
    %624 = vmatprep.subr.bf16.mxu0 0
    %625 = vmatpush1.bf16.msra.mxu0 %v484
    %626 = vmatprep.subr.bf16.mxu0 0
    %627 = vmatpush1.bf16.msra.mxu0 %v485
    %628 = vmatprep.subr.bf16.mxu0 0
    %629 = vmatpush1.bf16.msra.mxu0 %v486
    %630 = vmatprep.subr.bf16.mxu0 0
    %631 = vmatpush1.bf16.msra.mxu0 %v487
    %632 = vmatprep.mubr.bf16.mxu0 %v201
    %633 = vmatmul.mubr.bf16.gmra.mrb[0].mxu0 %v200
    %v634 = vpop.f32.mrb[0].mxu0
    %v635 = vadd.f32 %v186, %v634
    %v636 = vpop.f32.mrb[0].mxu0
    %v637 = vpop.f32.mrb[0].mxu0
    %v638 = vpop.f32.mrb[0].mxu0
    %639 = vdwg.mxu0
    %640 = vmatprep.subr.bf16.mxu0 0
    %641 = vmatpush1.bf16.msra.mxu0 %v488
    %642 = vmatprep.subr.bf16.mxu0 0
    %643 = vmatpush1.bf16.msra.mxu0 %v489
    %644 = vmatprep.subr.bf16.mxu0 0
    %645 = vmatpush1.bf16.msra.mxu0 %v490
    %646 = vmatprep.subr.bf16.mxu0 0
    %647 = vmatpush1.bf16.msra.mxu0 %v491
    %648 = vmatprep.subr.bf16.mxu0 0
    %649 = vmatpush1.bf16.msra.mxu0 %v492
    %650 = vmatprep.subr.bf16.mxu0 0
    %651 = vmatpush1.bf16.msra.mxu0 %v493
    %652 = vmatprep.subr.bf16.mxu0 0
    %653 = vmatpush1.bf16.msra.mxu0 %v494
    %654 = vmatprep.subr.bf16.mxu0 0
    %655 = vmatpush1.bf16.msra.mxu0 %v495
    %656 = vmatprep.subr.bf16.mxu0 0
    %657 = vmatpush1.bf16.msra.mxu0 %v496
    %658 = vmatprep.subr.bf16.mxu0 0
    %659 = vmatpush1.bf16.msra.mxu0 %v497
    %660 = vmatprep.subr.bf16.mxu0 0
    %661 = vmatpush1.bf16.msra.mxu0 %v498
    %662 = vmatprep.subr.bf16.mxu0 0
    %663 = vmatpush1.bf16.msra.mxu0 %v499
    %664 = vmatprep.subr.bf16.mxu0 0
    %665 = vmatpush1.bf16.msra.mxu0 %v500
    %666 = vmatprep.subr.bf16.mxu0 0
    %667 = vmatpush1.bf16.msra.mxu0 %v501
    %668 = vmatprep.subr.bf16.mxu0 0
    %669 = vmatpush1.bf16.msra.mxu0 %v502
    %670 = vmatprep.subr.bf16.mxu0 0
    %671 = vmatpush1.bf16.msra.mxu0 %v503
    %672 = vmatprep.mubr.bf16.mxu0 %v203
    %673 = vmatmul.mubr.bf16.gmra.mrb[0].mxu0 %v202
    %v674 = vpop.f32.mrb[0].mxu0
    %v675 = vadd.f32 %v635, %v674
    %v676 = vpop.f32.mrb[0].mxu0
    %v677 = vpop.f32.mrb[0].mxu0
    %v678 = vpop.f32.mrb[0].mxu0
    %679 = vdwg.mxu0
    %680 = vmatprep.subr.bf16.mxu0 0
    %681 = vmatpush1.bf16.msra.mxu0 %v504
    %682 = vmatprep.subr.bf16.mxu0 0
    %683 = vmatpush1.bf16.msra.mxu0 %v505
    %684 = vmatprep.subr.bf16.mxu0 0
    %685 = vmatpush1.bf16.msra.mxu0 %v506
    %686 = vmatprep.subr.bf16.mxu0 0
    %687 = vmatpush1.bf16.msra.mxu0 %v507
    %688 = vmatprep.subr.bf16.mxu0 0
    %689 = vmatpush1.bf16.msra.mxu0 %v508
    %690 = vmatprep.subr.bf16.mxu0 0
    %691 = vmatpush1.bf16.msra.mxu0 %v509
    %692 = vmatprep.subr.bf16.mxu0 0
    %693 = vmatpush1.bf16.msra.mxu0 %v510
    %694 = vmatprep.subr.bf16.mxu0 0
    %695 = vmatpush1.bf16.msra.mxu0 %v511
    %696 = vmatprep.subr.bf16.mxu0 0
    %697 = vmatpush1.bf16.msra.mxu0 %v512
    %698 = vmatprep.subr.bf16.mxu0 0
    %699 = vmatpush1.bf16.msra.mxu0 %v513
    %700 = vmatprep.subr.bf16.mxu0 0
    %701 = vmatpush1.bf16.msra.mxu0 %v514
    %702 = vmatprep.subr.bf16.mxu0 0
    %703 = vmatpush1.bf16.msra.mxu0 %v515
    %704 = vmatprep.subr.bf16.mxu0 0
    %705 = vmatpush1.bf16.msra.mxu0 %v516
    %706 = vmatprep.subr.bf16.mxu0 0
    %707 = vmatpush1.bf16.msra.mxu0 %v517
    %708 = vmatprep.subr.bf16.mxu0 0
    %709 = vmatpush1.bf16.msra.mxu0 %v518
    %710 = vmatprep.subr.bf16.mxu0 0
    %711 = vmatpush1.bf16.msra.mxu0 %v519
    %712 = vmatprep.mubr.bf16.mxu0 %v205
    %713 = vmatmul.mubr.bf16.gmra.mrb[0].mxu0 %v204
    %v714 = vpop.f32.mrb[0].mxu0
    %v715 = vadd.f32 %v675, %v714
    %v716 = vpop.f32.mrb[0].mxu0
    %v717 = vpop.f32.mrb[0].mxu0
    %v718 = vpop.f32.mrb[0].mxu0
    %719 = vdwg.mxu0
    %720 = vmatprep.subr.bf16.mxu0 0
    %721 = vmatpush1.bf16.msra.mxu0 %v520
    %722 = vmatprep.subr.bf16.mxu0 0
    %723 = vmatpush1.bf16.msra.mxu0 %v521
    %724 = vmatprep.subr.bf16.mxu0 0
    %725 = vmatpush1.bf16.msra.mxu0 %v522
    %726 = vmatprep.subr.bf16.mxu0 0
    %727 = vmatpush1.bf16.msra.mxu0 %v523
    %728 = vmatprep.subr.bf16.mxu0 0
    %729 = vmatpush1.bf16.msra.mxu0 %v524
    %730 = vmatprep.subr.bf16.mxu0 0
    %731 = vmatpush1.bf16.msra.mxu0 %v525
    %732 = vmatprep.subr.bf16.mxu0 0
    %733 = vmatpush1.bf16.msra.mxu0 %v526
    %734 = vmatprep.subr.bf16.mxu0 0
    %735 = vmatpush1.bf16.msra.mxu0 %v527
    %736 = vmatprep.subr.bf16.mxu0 0
    %737 = vmatpush1.bf16.msra.mxu0 %v528
    %738 = vmatprep.subr.bf16.mxu0 0
    %739 = vmatpush1.bf16.msra.mxu0 %v529
    %740 = vmatprep.subr.bf16.mxu0 0
    %741 = vmatpush1.bf16.msra.mxu0 %v530
    %742 = vmatprep.subr.bf16.mxu0 0
    %743 = vmatpush1.bf16.msra.mxu0 %v531
    %744 = vmatprep.subr.bf16.mxu0 0
    %745 = vmatpush1.bf16.msra.mxu0 %v532
    %746 = vmatprep.subr.bf16.mxu0 0
    %747 = vmatpush1.bf16.msra.mxu0 %v533
    %748 = vmatprep.subr.bf16.mxu0 0
    %749 = vmatpush1.bf16.msra.mxu0 %v534
    %750 = vmatprep.subr.bf16.mxu0 0
    %751 = vmatpush1.bf16.msra.mxu0 %v535
    %752 = vmatprep.mubr.bf16.mxu0 %v207
    %753 = vmatmul.mubr.bf16.gmra.mrb[0].mxu0 %v206
    %v754 = vpop.f32.mrb[0].mxu0
    %v755 = vadd.f32 %v715, %v754
    %v756 = vpop.f32.mrb[0].mxu0
    %v757 = vpop.f32.mrb[0].mxu0
    %v758 = vpop.f32.mrb[0].mxu0
    %759 = vdwg.mxu0
    %v760 = vmax.f32 %v755, 0.0
    %v761 = vld [vmem:[%s3] sm:$0x1]
    %v763 = vlaneseq
    %v764 = vshrl.u32 %v763, 7
    %v765 = vsub.s32 0, %v764
    %v766 = vrot.slane %v761, %v765
    %v768 = vmul.f32 %v760, %v766
    %769 = vadd.xlane.f32.xlu0 %v768
    %v770 = vpop.xlane.xlu0 %769
    %v771 = vld [vmem:[#allocation2] sm:$0x1]
    %v773 = vlaneseq
    %v774 = vshrl.u32 %v773, 7
    %v775 = vsub.s32 0, %v774
    %v776 = vrot.slane %v771, %v775
    %v778 = vadd.f32 %v770, %v776
    %vm779 = vcmask 7168
    %780 = vst.msk [vmem:[%s5] sm:$0xff] %vm779, %v778
    // Predicated region
    $region30: #{tpu_custom_call.1} parent=1 // pred_check
      _
    $region31: #{tpu_custom_call.1} parent=1 // pred_check_branch
      %782 = sbr.rel (0) target = $region33
    $region32: #{tpu_custom_call.1} parent=1 // pred_region
      _
    $region33: #{tpu_custom_call.1} parent=1 // pred_fallthru
      _
    // Predicated region
    $region34: #{tpu_custom_call.1} parent=1 // pred_check
      _
    $region35: #{tpu_custom_call.1} parent=1 // pred_check_branch
      %784 = sbr.rel (0) target = $region37
    $region36: #{tpu_custom_call.1} parent=1 // pred_region
      _
    $region37: #{tpu_custom_call.1} parent=1 // pred_fallthru
      _
    %785 = vsyncpa [#allocation4], 1
    %786 = vsyncpa [#allocation6], 1

</llo_original>
